<compile_context>
chip_gen: v7x
topology: tpu7x:2x2x1
jax: 0.10.0
libtpu: 0.0.40
codegen_flags: <defaults>
</compile_context>

<pallas_src>
import math

import jax
import jax.numpy as jnp
from jax.experimental import pallas as pl
from jax.experimental.pallas import tpu as pltpu


def _round_up(x, m):
    return ((x + m - 1) // m) * m


def _make_nmse_kernel(*, block_n, tile_m, chunk, n_rows, grid_n, needs_mask):
    n_chunks = block_n // chunk
    use_8row = (chunk % 8 == 0)

    def kernel(p_ref, t_ref, num_ref, den_ref):
        c = pl.program_id(0)          # row-block split (parallel, v7x megacore)
        n = pl.program_id(2)          # reduction step (last grid axis)

        @pl.when(n == 0)
        def _():
            num_ref[...] = jnp.zeros_like(num_ref)
            den_ref[...] = jnp.zeros_like(den_ref)

        row_base = (c * grid_n + n) * block_n

        def accumulate(masked):
            def body(j, carry):
                r0 = pl.multiple_of(j * chunk, chunk)
                p = p_ref[pl.ds(r0, chunk), :].astype(jnp.float32)
                t = t_ref[pl.ds(r0, chunk), :].astype(jnp.float32)
                if masked:
                    rows = jax.lax.broadcasted_iota(
                        jnp.int32, (chunk, tile_m), 0)
                    valid = (row_base + r0 + rows) < n_rows
                    p = jnp.where(valid, p, 0.0)
                    t = jnp.where(valid, t, 0.0)
                diff = t - p
                sq_num = diff * diff
                sq_den = t * t
                if use_8row:
                    # Fold rows into the 8-sublane accumulator: pure VPU adds,
                    # no per-step cross-sublane reduce.
                    num_ref[...] += jnp.sum(
                        sq_num.reshape(chunk // 8, 8, tile_m), axis=0)
                    den_ref[...] += jnp.sum(
                        sq_den.reshape(chunk // 8, 8, tile_m), axis=0)
                else:
                    num_ref[0:1, :] += jnp.sum(sq_num, axis=0, keepdims=True)
                    den_ref[0:1, :] += jnp.sum(sq_den, axis=0, keepdims=True)
                return carry

            jax.lax.fori_loop(0, n_chunks, body, 0)

        if needs_mask:
            in_bounds = row_base + block_n <= n_rows

            @pl.when(in_bounds)
            def _():
                accumulate(False)          # hot path: no masking

            @pl.when(jnp.logical_not(in_bounds))
            def _():
                accumulate(True)           # tail / clamped block only
        else:
            accumulate(False)

    return kernel


def nmse_loss(pred, target, *, block_n=None):
    if pred.shape != target.shape:
        raise ValueError(
            "Target size ({}) must be the same as input size ({})".format(
                target.shape, pred.shape))

    N = pred.shape[0]
    M = 1
    for d in pred.shape[1:]:
        M *= d

    p2 = pred.reshape(N, M)
    t2 = target.reshape(N, M)
    itemsize = p2.dtype.itemsize
    sub = 8 * max(1, 4 // itemsize)   # native sublane multiple: f32 8, bf16 16, i8 32

    # ---- Lane-densify small feature dims by folding rows into the lane axis.
    #      k = largest divisor of N with k <= lcm(M,128)//M  -> free reshape, no pad.
    k_fold = 1
    if M < 128 and N > 1:
        k_max = 128 // math.gcd(M, 128)       # lcm(M, 128) // M
        for cand in range(min(k_max, N), 0, -1):
            if N % cand == 0:
                k_fold = cand
                break
    if k_fold > 1:
        p2 = p2.reshape(N // k_fold, k_fold * M)
        t2 = t2.reshape(N // k_fold, k_fold * M)
    n_rows, m_f = p2.shape

    # ---- VMEM budget (generation aware: v7x has 64 MiB, v5e/v6e 128 MiB).
    try:
        vmem_cap = int(pltpu.get_tpu_info().vmem_capacity_bytes)
    except Exception:
        vmem_cap = 64 * 1024 * 1024           # conservative (v7x) fallback
    budget = int(vmem_cap * 0.5)              # double-buffered input blocks

    rows_cap = (n_rows // sub) * sub if n_rows >= sub else n_rows

    # ---- Feature tiling: prefer one full-width block (contiguous HBM rows).
    w_full = _round_up(m_f, 128)
    rows_pref = max(1, min(max(sub, 256), rows_cap))
    if 2 * 2 * rows_pref * w_full * itemsize <= budget:
        tile_m, grid_m = m_f, 1
    else:
        tile_m = (budget // (2 * 2 * rows_pref * itemsize)) // 128 * 128
        tile_m = int(max(512, min(tile_m, w_full)))
        grid_m = -(-m_f // tile_m)
    w_pad = _round_up(tile_m, 128)            # VMEM lane footprint per block row

    # ---- Reduction (row) block size straight from the VMEM budget; no 2048 cap.
    if block_n is None:
        block_n = budget // (2 * 2 * w_pad * itemsize)
    block_n = int(block_n)
    if n_rows >= sub:
        block_n = max(sub, (block_n // sub) * sub)
        block_n = min(block_n, rows_cap)
        # In-kernel chunking bounds vector live ranges (and compile time).
        chunk = max(sub, min(512, (65536 // w_pad) // sub * sub))
        chunk = min(chunk, block_n)
        block_n = (block_n // chunk) * chunk
    else:
        block_n = n_rows                      # tiny batch: one full-dim block
        chunk = block_n

    total_rb = -(-n_rows // block_n)
    split_ok = (grid_m == 1 and total_rb >= 2
                and (total_rb % 2 == 0 or total_rb >= 16))
    n_splits = 2 if split_ok else 1           # engages both TCs on v7x
    grid_n = -(-total_rb // n_splits)
    needs_mask = (n_splits * grid_n * block_n) != n_rows

    m_out = grid_m * tile_m
    kernel = _make_nmse_kernel(block_n=block_n, tile_m=tile_m, chunk=chunk,
                               n_rows=n_rows, grid_n=grid_n,
                               needs_mask=needs_mask)

    # Clamp keeps the (rare) fully-out-of-range split block inside the array;
    # its contribution is zeroed by the in-kernel mask.
    in_index = lambda c, m, n: (jnp.minimum(c * grid_n + n, total_rb - 1), m)
    out_index = lambda c, m, n: (c, m)

    footprint = (2 * 2 * block_n * w_pad * itemsize      # double-buffered inputs
                 + 2 * 2 * 8 * w_pad * 4                 # (8, tile_m) f32 outputs
                 + 6 * chunk * w_pad * 4)                # in-kernel f32 temporaries
    vmem_limit = int(min(vmem_cap,
                         max(footprint + 8 * 1024 * 1024, 16 * 1024 * 1024)))

    cost = pl.CostEstimate(
        flops=5 * n_rows * m_f,
        transcendentals=0,
        bytes_accessed=2 * n_rows * m_f * itemsize + 2 * n_splits * 8 * m_out * 4,
    )

    num_out, den_out = pl.pallas_call(
        kernel,
        out_shape=(
            jax.ShapeDtypeStruct((n_splits * 8, m_out), jnp.float32),
            jax.ShapeDtypeStruct((n_splits * 8, m_out), jnp.float32),
        ),
        grid_spec=pltpu.PrefetchScalarGridSpec(
            num_scalar_prefetch=0,
            grid=(n_splits, grid_m, grid_n),   # reduction axis last
            in_specs=[
                pl.BlockSpec((block_n, tile_m), in_index),
                pl.BlockSpec((block_n, tile_m), in_index),
            ],
            out_specs=[
                pl.BlockSpec((8, tile_m), out_index),
                pl.BlockSpec((8, tile_m), out_index),
            ],
        ),
        compiler_params=pltpu.CompilerParams(
            dimension_semantics=("parallel", "parallel", "arbitrary"),
            vmem_limit_bytes=vmem_limit,
        ),
        cost_estimate=cost,
    )(p2, t2)

    # ---- Finalize: collapse partial rows, drop ragged columns, un-fold, divide.
    num_cols = num_out[:, :m_f].sum(axis=0)
    den_cols = den_out[:, :m_f].sum(axis=0)
    if k_fold > 1:
        num_cols = num_cols.reshape(k_fold, M).sum(axis=0)
        den_cols = den_cols.reshape(k_fold, M).sum(axis=0)
    return jnp.sum(num_cols / den_cols)


if __name__ == "__main__":
    key = jax.random.PRNGKey(0)
    k1, k2, k3, k4, k5, k6 = jax.random.split(key, 6)

    # (batch, C, H, W) — flattened feature dim M = 256, single full-width block.
    shape = (16, 4, 8, 8)
    pred = jax.random.normal(k1, shape, dtype=jnp.float32)
    target = jax.random.normal(k2, shape, dtype=jnp.float32) + 1.0
    loss = nmse_loss(pred, target)
    jax.block_until_ready(loss)
    num = jnp.sum((target - pred) ** 2, axis=0)
    den = jnp.sum(target ** 2, axis=0)
    ref = jnp.sum(num / den)
    assert jnp.allclose(loss, ref, rtol=1e-5, atol=1e-5), (loss, ref)

    # Small-feature shape exercising the M<128 lcm lane-fold (k=10 -> 120 lanes).
    shape2 = (10, 3, 4)
    pred2 = jax.random.normal(k3, shape2, dtype=jnp.float32)
    target2 = jax.random.normal(k4, shape2, dtype=jnp.float32) + 1.0
    loss2 = nmse_loss(pred2, target2)
    jax.block_until_ready(loss2)
    num2 = jnp.sum((target2 - pred2) ** 2, axis=0)
    den2 = jnp.sum(target2 ** 2, axis=0)
    ref2 = jnp.sum(num2 / den2)
    assert jnp.allclose(loss2, ref2, rtol=1e-5, atol=1e-5), (loss2, ref2)

    # Ragged batch exercising the masked tail block and the 2-way row split.
    shape3 = (37, 4, 8, 8)
    pred3 = jax.random.normal(k5, shape3, dtype=jnp.float32)
    target3 = jax.random.normal(k6, shape3, dtype=jnp.float32) + 1.0
    loss3 = nmse_loss(pred3, target3)
    jax.block_until_ready(loss3)
    num3 = jnp.sum((target3 - pred3) ** 2, axis=0)
    den3 = jnp.sum(target3 ** 2, axis=0)
    ref3 = jnp.sum(num3 / den3)
    assert jnp.allclose(loss3, ref3, rtol=1e-5, atol=1e-5), (loss3, ref3)

    print("KERNEL_OK")
</pallas_src>

<mosaic_0001>
module attributes {stable_mosaic.version = 11 : i64} {
  func.func @kernel(%arg0: i32, %arg1: i32, %arg2: i32, %arg3: memref<16x256xf32, #tpu.memory_space<vmem>>, %arg4: memref<16x256xf32, #tpu.memory_space<vmem>>, %arg5: memref<8x256xf32, #tpu.memory_space<vmem>>, %arg6: memref<8x256xf32, #tpu.memory_space<vmem>>) attributes {dimension_semantics = [#tpu.dimension_semantics<parallel>, #tpu.dimension_semantics<parallel>, #tpu.dimension_semantics<arbitrary>], iteration_bounds = array<i64: 1, 1, 1>, scalar_prefetch = 0 : i64, scratch_operands = 0 : i64, tpu.core_type = #tpu.core_type<tc>, window_params = [{transform_indices = @transform_0, window_bounds = array<i64: 16, 256>}, {transform_indices = @transform_1, window_bounds = array<i64: 16, 256>}, {transform_indices = @transform_2, window_bounds = array<i64: 8, 256>}, {transform_indices = @transform_3, window_bounds = array<i64: 8, 256>}]} {
    %c0_i32 = arith.constant 0 : i32
    %0 = arith.cmpi eq, %arg2, %c0_i32 : i32
    %1 = arith.extui %0 : i1 to i32
    %c0_i32_0 = arith.constant 0 : i32
    %2 = arith.cmpi ne, %1, %c0_i32_0 : i32
    scf.if %2 {
      %cst_12 = arith.constant 0.000000e+00 : f32
      %22 = vector.broadcast %cst_12 : f32 to vector<8x256xf32>
      %c0_13 = arith.constant 0 : index
      %c0_14 = arith.constant 0 : index
      %23 = vector.load %arg5[%c0_13, %c0_14] : memref<8x256xf32, #tpu.memory_space<vmem>>, vector<8x256xf32>
      tpu.vector_store %arg5[%c0_13, %c0_14], %22 {strides = array<i32>} : memref<8x256xf32, #tpu.memory_space<vmem>>, vector<8x256xf32>,
      %cst_15 = arith.constant 0.000000e+00 : f32
      %24 = vector.broadcast %cst_15 : f32 to vector<8x256xf32>
      %c0_16 = arith.constant 0 : index
      %c0_17 = arith.constant 0 : index
      %25 = vector.load %arg6[%c0_16, %c0_17] : memref<8x256xf32, #tpu.memory_space<vmem>>, vector<8x256xf32>
      tpu.vector_store %arg6[%c0_16, %c0_17], %24 {strides = array<i32>} : memref<8x256xf32, #tpu.memory_space<vmem>>, vector<8x256xf32>,
    } else {
    }
    %c0_i32_1 = arith.constant 0 : i32
    %c16_i32 = arith.constant 16 : i32
    %3 = arith.muli %c0_i32_1, %c16_i32 : i32
    %4 = tpu.assume_multiple %3, 16 : i32
    %5 = arith.index_cast %4 : i32 to index
    %c0 = arith.constant 0 : index
    %6 = vector.load %arg3[%5, %c0] : memref<16x256xf32, #tpu.memory_space<vmem>>, vector<16x256xf32>
    %7 = arith.index_cast %4 : i32 to index
    %c0_2 = arith.constant 0 : index
    %8 = vector.load %arg4[%7, %c0_2] : memref<16x256xf32, #tpu.memory_space<vmem>>, vector<16x256xf32>
    %9 = arith.subf %8, %6 : vector<16x256xf32>
    %10 = arith.mulf %9, %9 : vector<16x256xf32>
    %11 = arith.mulf %8, %8 : vector<16x256xf32>
    %c0_3 = arith.constant 0 : index
    %c0_4 = arith.constant 0 : index
    %12 = vector.load %arg5[%c0_3, %c0_4] : memref<8x256xf32, #tpu.memory_space<vmem>>, vector<8x256xf32>
    %13 = vector.shape_cast %10 : vector<16x256xf32> to vector<2x8x256xf32>
    %cst = arith.constant dense<0.000000e+00> : vector<8x256xf32>
    %14 = vector.multi_reduction <add>, %13, %cst [0] : vector<2x8x256xf32> to vector<8x256xf32>
    %15 = arith.addf %12, %14 : vector<8x256xf32>
    %c0_5 = arith.constant 0 : index
    %c0_6 = arith.constant 0 : index
    %16 = vector.load %arg5[%c0_5, %c0_6] : memref<8x256xf32, #tpu.memory_space<vmem>>, vector<8x256xf32>
    tpu.vector_store %arg5[%c0_5, %c0_6], %15 {strides = array<i32>} : memref<8x256xf32, #tpu.memory_space<vmem>>, vector<8x256xf32>,
    %c0_7 = arith.constant 0 : index
    %c0_8 = arith.constant 0 : index
    %17 = vector.load %arg6[%c0_7, %c0_8] : memref<8x256xf32, #tpu.memory_space<vmem>>, vector<8x256xf32>
    %18 = vector.shape_cast %11 : vector<16x256xf32> to vector<2x8x256xf32>
    %cst_9 = arith.constant dense<0.000000e+00> : vector<8x256xf32>
    %19 = vector.multi_reduction <add>, %18, %cst_9 [0] : vector<2x8x256xf32> to vector<8x256xf32>
    %20 = arith.addf %17, %19 : vector<8x256xf32>
    %c0_10 = arith.constant 0 : index
    %c0_11 = arith.constant 0 : index
    %21 = vector.load %arg6[%c0_10, %c0_11] : memref<8x256xf32, #tpu.memory_space<vmem>>, vector<8x256xf32>
    tpu.vector_store %arg6[%c0_10, %c0_11], %20 {strides = array<i32>} : memref<8x256xf32, #tpu.memory_space<vmem>>, vector<8x256xf32>,
    %c1_i32 = arith.constant 1 : i32
    return
  }
  func.func @transform_0(%arg0: i32, %arg1: i32, %arg2: i32) -> (i32, i32) {
    %c1_i32 = arith.constant 1 : i32
    %0 = arith.muli %arg0, %c1_i32 : i32
    %1 = arith.addi %0, %arg2 : i32
    %c0_i32 = arith.constant 0 : i32
    %2 = arith.minsi %1, %c0_i32 : i32
    %c0_i32_0 = arith.constant 0 : i32
    return %2, %arg1 : i32, i32
  }
  func.func @transform_1(%arg0: i32, %arg1: i32, %arg2: i32) -> (i32, i32) {
    %c1_i32 = arith.constant 1 : i32
    %0 = arith.muli %arg0, %c1_i32 : i32
    %1 = arith.addi %0, %arg2 : i32
    %c0_i32 = arith.constant 0 : i32
    %2 = arith.minsi %1, %c0_i32 : i32
    %c0_i32_0 = arith.constant 0 : i32
    return %2, %arg1 : i32, i32
  }
  func.func @transform_2(%arg0: i32, %arg1: i32, %arg2: i32) -> (i32, i32) {
    %c0_i32 = arith.constant 0 : i32
    return %arg0, %arg1 : i32, i32
  }
  func.func @transform_3(%arg0: i32, %arg1: i32, %arg2: i32) -> (i32, i32) {
    %c0_i32 = arith.constant 0 : i32
    return %arg0, %arg1 : i32, i32
  }
}

</mosaic_0001>

<llo_original>
// kernel: tpu_custom_call.1
$region0: #{tpu_custom_call.1}
  #allocation0 [shape = 'u32[]', space=smem, size = 0x4, offset = 0x4, fixed_abs, tag = 'smem constant byte address 0x4 - core index']
  #allocation1 [shape = 'u32[144,128]{1,0:T(1,128)}', space=vmem, size = 0x12000, scoped, tag = 'internal scratch']
  %s0 = inlined_call_operand.hbm [shape: f32[16,256], index: 0, kind: input, shape index: {}]
  %s1 = inlined_call_operand.hbm [shape: f32[16,256], index: 1, kind: input, shape index: {}]
  %s2 = inlined_call_operand.hbm [shape: f32[8,256], index: 2, kind: output, shape index: {0}]
  %s3 = inlined_call_operand.hbm [shape: f32[8,256], index: 3, kind: output, shape index: {1}]
  %4 = xla_tuple %s2, %s3
  %s5 = sld [smem:[#allocation0]]
  $region38: #{tpu_custom_call.1} parent=0
    _
  %s7 = ssub.s32 1, %s5
  %s8 = scalar_select 0, %s7, %s5
  $region1: #{tpu_custom_call.1} parent=0
    #allocation2 [shape = 'u8[16384]{0}', space=vmem, size = 0x4000, scoped, tag = 'input window, operand 0, single buffered']
    #allocation3 [shape = 's32[1]{0}', space=sflag, size = 0x4, scoped, tag = 'scoped memory for tpu_custom_call.1']
    #allocation4 [shape = 's32[1]{0}', space=sflag, size = 0x4, scoped, tag = 'scoped memory for tpu_custom_call.1']
    #allocation5 [shape = 'u8[16384]{0}', space=vmem, size = 0x4000, scoped, tag = 'input window, operand 1, single buffered']
    #allocation6 [shape = 's32[1]{0}', space=sflag, size = 0x4, scoped, tag = 'scoped memory for tpu_custom_call.1']
    #allocation7 [shape = 'u8[8192]{0}', space=vmem, size = 0x2000, scoped, tag = 'output window, operand 0, single buffered']
    #allocation8 [shape = 'u8[8192]{0}', space=vmem, size = 0x2000, scoped, tag = 'output window, operand 1, single buffered']
    #allocation9 [shape = 's32[1]{0}', space=sflag, size = 0x4, scoped, tag = 'scoped memory for tpu_custom_call.1']
    %9 = vsyncpa [#allocation3], 0
    %10 = vsyncpa [#allocation6], 0
    %11 = vsyncpa [#allocation4], 0
    %12 = vsyncpa [#allocation9], 0
    // Predicated region
    $region2: #{tpu_custom_call.1} parent=1 // pred_check
      _
    $region3: #{tpu_custom_call.1} parent=1 // pred_check_branch
      %14 = sbr.rel (0) target = $region5
    $region4: #{tpu_custom_call.1} parent=1 // pred_region
      %s15 = sadd.s32 0, 0
      %p16 = scmp.lt.s32.totalorder %s15, 0
      %s17 = scalar_select %p16, %s15, 0
      %s18 = smul.u32 2, %s17
      %s20 = ssub.s32 512, 512
      %21 = vsyncadd [#allocation3], %s20
      %s22 = smul.addr %s18, 2
      %s23 = smul.addr %s22, 128
      %s24 = scalar_lea.hbm %s0, %s23
      %s25 = sshll.u32 [#allocation2], 4
      %s26 = int_to_ptr.vmem [resolvable:$true] %s25
      %31 = dma.hbm_to_vmem [thread:$0]  %s24, 512, %s26, [#allocation3], 256, 256, 16
    $region5: #{tpu_custom_call.1} parent=1 // pred_fallthru
      _
    // Predicated region
    $region6: #{tpu_custom_call.1} parent=1 // pred_check
      _
    $region7: #{tpu_custom_call.1} parent=1 // pred_check_branch
      %33 = sbr.rel (0) target = $region9
    $region8: #{tpu_custom_call.1} parent=1 // pred_region
      %s34 = sadd.s32 0, 0
      %p35 = scmp.lt.s32.totalorder %s34, 0
      %s36 = scalar_select %p35, %s34, 0
      %s37 = smul.u32 2, %s36
      %s39 = ssub.s32 512, 512
      %40 = vsyncadd [#allocation6], %s39
      %s41 = smul.addr %s37, 2
      %s42 = smul.addr %s41, 128
      %s43 = scalar_lea.hbm %s1, %s42
      %s44 = sshll.u32 [#allocation5], 4
      %s45 = int_to_ptr.vmem [resolvable:$true] %s44
      %50 = dma.hbm_to_vmem [thread:$0]  %s43, 512, %s45, [#allocation6], 256, 256, 16
    $region9: #{tpu_custom_call.1} parent=1 // pred_fallthru
      _
    // Predicated region
    $region10: #{tpu_custom_call.1} parent=1 // pred_check
      _
    $region11: #{tpu_custom_call.1} parent=1 // pred_check_branch
      %52 = sbr.rel (0) target = $region13
    $region12: #{tpu_custom_call.1} parent=1 // pred_region
      %53 = dma.done [#allocation3], 512
    $region13: #{tpu_custom_call.1} parent=1 // pred_fallthru
      _
    // Predicated region
    $region14: #{tpu_custom_call.1} parent=1 // pred_check
      _
    $region15: #{tpu_custom_call.1} parent=1 // pred_check_branch
      %55 = sbr.rel (0) target = $region17
    $region16: #{tpu_custom_call.1} parent=1 // pred_region
      %56 = dma.done [#allocation6], 512
    $region17: #{tpu_custom_call.1} parent=1 // pred_fallthru
      _
    %s57 = sadd.s32 0, 0
    %p58 = scmp.lt.s32.totalorder %s57, 0
    %s59 = scalar_select %p58, %s57, 0
    %s60 = smul.u32 2, %s59
    %s61 = sadd.s32 0, 0
    %p62 = scmp.lt.s32.totalorder %s61, 0
    %s63 = scalar_select %p62, %s61, 0
    %s64 = smul.u32 2, %s63
    %p65 = scmp.eq.s32.totalorder 0, 0
    // Predicated region
    $region18: #{tpu_custom_call.1} parent=1 // pred_check
      %p66 = pneg %p65
    $region19: #{tpu_custom_call.1} parent=1 // pred_check_branch
      %68 = sbr.rel (%p66) target = $region21
    $region20: #{tpu_custom_call.1} parent=1 // pred_region
      %69 = vst [vmem:[#allocation7] sm:$0xff] 0.0
      %70 = vst [vmem:[#allocation7 + $0x8] sm:$0xff] 0.0
      %71 = vst [vmem:[#allocation8] sm:$0xff] 0.0
      %72 = vst [vmem:[#allocation8 + $0x8] sm:$0xff] 0.0
    $region21: #{tpu_custom_call.1} parent=1 // pred_fallthru
      _
    %s73 = smul.u32 0, 2
    %s74 = smul.addr %s73, 8
    %s75 = scalar_lea.vmem [#allocation2], %s74
    %v76 = vld [vmem:[%s75] sm:$0xff]
    %v77 = vld [vmem:[%s75 + $0x8] sm:$0xff]
    %v78 = vld [vmem:[%s75 + $0x10] sm:$0xff]
    %v79 = vld [vmem:[%s75 + $0x18] sm:$0xff]
    %s80 = smul.addr %s73, 8
    %s81 = scalar_lea.vmem [#allocation5], %s80
    %v82 = vld [vmem:[%s81] sm:$0xff]
    %v83 = vld [vmem:[%s81 + $0x8] sm:$0xff]
    %v84 = vld [vmem:[%s81 + $0x10] sm:$0xff]
    %v85 = vld [vmem:[%s81 + $0x18] sm:$0xff]
    %v86 = vsub.f32 %v82, %v76
    %v87 = vsub.f32 %v83, %v77
    %v88 = vsub.f32 %v84, %v78
    %v89 = vsub.f32 %v85, %v79
    %v90 = vmul.f32 %v86, %v86
    %v91 = vmul.f32 %v87, %v87
    %v92 = vmul.f32 %v88, %v88
    %v93 = vmul.f32 %v89, %v89
    %v94 = vmul.f32 %v82, %v82
    %v95 = vmul.f32 %v83, %v83
    %v96 = vmul.f32 %v84, %v84
    %v97 = vmul.f32 %v85, %v85
    %v98 = vld [vmem:[#allocation7] sm:$0xff]
    %v99 = vld [vmem:[#allocation7 + $0x8] sm:$0xff]
    %v100 = vadd.f32 %v90, %v92
    %v101 = vadd.f32 %v91, %v93
    %v102 = vadd.f32 %v98, %v100
    %v103 = vadd.f32 %v99, %v101
    %104 = vst [vmem:[#allocation7] sm:$0xff] %v102
    %105 = vst [vmem:[#allocation7 + $0x8] sm:$0xff] %v103
    %v106 = vld [vmem:[#allocation8] sm:$0xff]
    %v107 = vld [vmem:[#allocation8 + $0x8] sm:$0xff]
    %v108 = vadd.f32 %v94, %v96
    %v109 = vadd.f32 %v95, %v97
    %v110 = vadd.f32 %v106, %v108
    %v111 = vadd.f32 %v107, %v109
    %112 = vst [vmem:[#allocation8] sm:$0xff] %v110
    %113 = vst [vmem:[#allocation8 + $0x8] sm:$0xff] %v111
    // Predicated region
    $region22: #{tpu_custom_call.1} parent=1 // pred_check
      _
    $region23: #{tpu_custom_call.1} parent=1 // pred_check_branch
      %115 = sbr.rel (0) target = $region25
    $region24: #{tpu_custom_call.1} parent=1 // pred_region
      %s117 = ssub.s32 256, 256
      %118 = vsyncadd [#allocation4], %s117
      %s120 = sshll.u32 [#allocation7], 4
      %s121 = int_to_ptr.vmem [resolvable:$true] %s120
      %123 = dma.vmem_to_hbm [thread:$0]  %s121, 256, %s2, [#allocation4]
    $region25: #{tpu_custom_call.1} parent=1 // pred_fallthru
      _
    // Predicated region
    $region26: #{tpu_custom_call.1} parent=1 // pred_check
      _
    $region27: #{tpu_custom_call.1} parent=1 // pred_check_branch
      %125 = sbr.rel (0) target = $region29
    $region28: #{tpu_custom_call.1} parent=1 // pred_region
      %s127 = ssub.s32 256, 256
      %128 = vsyncadd [#allocation9], %s127
      %s130 = sshll.u32 [#allocation8], 4
      %s131 = int_to_ptr.vmem [resolvable:$true] %s130
      %133 = dma.vmem_to_hbm [thread:$0]  %s131, 256, %s3, [#allocation9]
    $region29: #{tpu_custom_call.1} parent=1 // pred_fallthru
      _
    // Predicated region
    $region30: #{tpu_custom_call.1} parent=1 // pred_check
      _
    $region31: #{tpu_custom_call.1} parent=1 // pred_check_branch
      %135 = sbr.rel (0) target = $region33
    $region32: #{tpu_custom_call.1} parent=1 // pred_region
      %136 = dma.done [#allocation4], 256
    $region33: #{tpu_custom_call.1} parent=1 // pred_fallthru
      _
    // Predicated region
    $region34: #{tpu_custom_call.1} parent=1 // pred_check
      _
    $region35: #{tpu_custom_call.1} parent=1 // pred_check_branch
      %138 = sbr.rel (0) target = $region37
    $region36: #{tpu_custom_call.1} parent=1 // pred_region
      %139 = dma.done [#allocation9], 256
    $region37: #{tpu_custom_call.1} parent=1 // pred_fallthru
      _
    %140 = vsyncpa [#allocation3], 1
    %141 = vsyncpa [#allocation6], 1
    %142 = vsyncpa [#allocation4], 1
    %143 = vsyncpa [#allocation9], 1

</llo_original>
